<compile_context>
chip_gen: v7x
topology: tpu7x:2x2x1
jax: 0.10.0
libtpu: 0.0.40
codegen_flags: <defaults>
</compile_context>

<pallas_src>
import functools

import jax
import jax.numpy as jnp
from jax.experimental import pallas as pl
from jax.experimental.pallas import tpu as pltpu

LANE = 128           # vreg lane width
BF16_SUBLANE = 16    # sublane packing granularity for bf16
NEG_BIG = -1e9       # folded softmax mask for padded action lanes
TILE_B_MAX = 1024    # top of the measured mem-bound tile sweep (512->85%, 1024->86%)


def _round_up(x, m):
    return (x + m - 1) // m * m


def actor_kernel(x_ref, p_ref, o_ref, *, s_pack, h_pad, a_pad, bias_rows):
    # Two bf16 MXU matmuls (f32 accumulation) + VPU relu/adds + EUP exp + row softmax,
    # all fused on lane-dense (.., 128) tiles.  Padded action lanes carry b2 = -1e9,
    # so exp() drives them to exactly 0 (no iota/where needed).
    x = x_ref[...]                                                     # (TB, s_pack) bf16

    r = 0
    w1 = p_ref[r:r + s_pack, 0:h_pad]                                  # (s_pack, h_pad) bf16
    r += s_pack
    b1 = p_ref[r:r + bias_rows, 0:h_pad].astype(jnp.float32)[0:1, :]   # (1, h_pad) f32
    r += bias_rows
    w2 = p_ref[r:r + h_pad, 0:a_pad]                                   # (h_pad, a_pad) bf16
    r += h_pad
    b2 = p_ref[r:r + bias_rows, 0:a_pad].astype(jnp.float32)[0:1, :]   # (1, a_pad) f32

    h = jnp.dot(x, w1, preferred_element_type=jnp.float32) + b1        # (TB, h_pad)
    h = jnp.maximum(h, 0.0)                                            # ReLU
    logits = jnp.dot(h.astype(jnp.bfloat16), w2,
                     preferred_element_type=jnp.float32) + b2          # (TB, a_pad)
    m = jnp.max(logits, axis=-1, keepdims=True)
    e = jnp.exp(logits - m)
    denom = jnp.sum(e, axis=-1, keepdims=True)
    # Exact divide (not approx reciprocal): rows sum to 1 for downstream sampling;
    # it is off the critical path at these (mem/overhead-bound) shapes.
    o_ref[...] = (e / denom).astype(o_ref.dtype)


def pack_params(w1, b1, w2, b2):
    """Pack all parameters into one lane-padded bf16 slab (single DMA)."""
    s, h = w1.shape
    h2, a = w2.shape
    assert h2 == h
    s_pack = _round_up(s, BF16_SUBLANE)   # W1 keeps only its true (sublane-aligned) K rows
    h_pad = _round_up(h, LANE)
    a_pad = _round_up(a, LANE)
    bias_rows = BF16_SUBLANE              # keep every sub-block sublane aligned
    cols = max(h_pad, a_pad)
    rows = s_pack + bias_rows + h_pad + bias_rows

    slab = jnp.zeros((rows, cols), jnp.float32)
    slab = slab.at[0:s, 0:h].set(w1)                                   # W1
    slab = slab.at[s_pack:s_pack + 1, 0:h].set(b1.reshape(1, h))       # b1
    r = s_pack + bias_rows
    slab = slab.at[r:r + h, 0:a].set(w2)                               # W2
    r += h_pad
    b2_row = jnp.full((1, a_pad), NEG_BIG, jnp.float32)                # b2 (+ softmax mask
    b2_row = b2_row.at[0, 0:a].set(b2.reshape(-1))                     #  for padded lanes)
    slab = slab.at[r:r + 1, 0:a_pad].set(b2_row)

    return slab.astype(jnp.bfloat16), (s_pack, h_pad, a_pad, bias_rows)


@functools.partial(jax.jit, static_argnames=("dims", "action_dim"))
def actor_forward(state, slab, dims, action_dim):
    s_pack, h_pad, a_pad, bias_rows = dims
    batch, s = state.shape

    # Batch tiling (mem/overhead-bound kernel):
    #   * big batches: 512-1024 row tiles (top of the measured HBM-roofline sweep;
    #     VMEM footprint is ~1-2 MB, far under even v7x's 64 MiB).
    #   * small batches: still split into >= 2 blocks so the "parallel" grid axis puts
    #     one block on each TensorCore of a v7x.
    if batch >= 2 * TILE_B_MAX:
        tile_b = TILE_B_MAX
    else:
        tile_b = max(_round_up(-(-batch // 2), BF16_SUBLANE), BF16_SUBLANE)
    b_pad = max(_round_up(batch, tile_b), 2 * tile_b)

    # Cast to bf16 BEFORE padding and keep the true (16-aligned) feature width: no
    # full-128-lane f32 padding pass over mostly-zero data in the wrapper.
    xb = state.astype(jnp.bfloat16)
    x = jnp.zeros((b_pad, s_pack), jnp.bfloat16).at[:batch, :s].set(xb)

    p_rows, p_cols = slab.shape
    flops = 2 * b_pad * (s_pack * h_pad + h_pad * a_pad)
    bytes_accessed = x.size * 2 + slab.size * 2 + b_pad * a_pad * 2

    out = pl.pallas_call(
        functools.partial(actor_kernel, s_pack=s_pack, h_pad=h_pad,
                          a_pad=a_pad, bias_rows=bias_rows),
        out_shape=jax.ShapeDtypeStruct((b_pad, a_pad), jnp.bfloat16),   # half the writeback bytes
        grid=(b_pad // tile_b,),
        in_specs=[
            pl.BlockSpec((tile_b, s_pack), lambda i: (i, 0)),   # state tile (narrow last dim)
            pl.BlockSpec((p_rows, p_cols), lambda i: (0, 0)),   # param slab (1 DMA, reused)
        ],
        out_specs=pl.BlockSpec((tile_b, a_pad), lambda i: (i, 0)),      # lane-dense stores
        compiler_params=pltpu.CompilerParams(
            dimension_semantics=("parallel",),   # shard batch tiles across TCs on v7x
        ),
        cost_estimate=pl.CostEstimate(
            flops=flops,
            transcendentals=b_pad * a_pad,
            bytes_accessed=bytes_accessed,
        ),
    )(x, slab)
    # Slice off batch/lane padding; f32 to match the PyTorch module's output dtype.
    # (Fused under jit; padded rows hold finite garbage softmax values and are dropped.)
    return out[:batch, :action_dim].astype(jnp.float32)


def init_params(key, state_dim, hidden_dim, action_dim):
    # Deterministic synthetic init (roughly PyTorch Linear's U(-1/sqrt(fan_in), +...)).
    k1, k2, k3, k4 = jax.random.split(key, 4)
    lim1 = 1.0 / jnp.sqrt(state_dim)
    lim2 = 1.0 / jnp.sqrt(hidden_dim)
    w1 = jax.random.uniform(k1, (state_dim, hidden_dim), jnp.float32, -lim1, lim1)
    b1 = jax.random.uniform(k2, (1, hidden_dim), jnp.float32, -lim1, lim1)
    w2 = jax.random.uniform(k3, (hidden_dim, action_dim), jnp.float32, -lim2, lim2)
    b2 = jax.random.uniform(k4, (1, action_dim), jnp.float32, -lim2, lim2)
    return w1, b1, w2, b2


if __name__ == "__main__":
    state_dim, hidden_dim, action_dim = 16, 32, 8
    batch = 8

    key = jax.random.PRNGKey(0)
    kx, kp = jax.random.split(key)
    state = jax.random.normal(kx, (batch, state_dim), jnp.float32)
    w1, b1, w2, b2 = init_params(kp, state_dim, hidden_dim, action_dim)

    slab, dims = pack_params(w1, b1, w2, b2)
    out = actor_forward(state, slab, dims=dims, action_dim=action_dim)
    out = jax.block_until_ready(out)
    assert out.shape == (batch, action_dim)

    # Reference 1: same bf16-rounded operands as the kernel (isolates MXU accumulation
    # order + bf16 output quantization only).
    f32 = jnp.float32
    xb = state.astype(jnp.bfloat16).astype(f32)
    w1b = w1.astype(jnp.bfloat16).astype(f32)
    b1b = b1.astype(jnp.bfloat16).astype(f32)
    w2b = w2.astype(jnp.bfloat16).astype(f32)
    b2b = b2.astype(jnp.bfloat16).astype(f32)
    h_ref = jnp.maximum(xb @ w1b + b1b, 0.0)
    h_ref = h_ref.astype(jnp.bfloat16).astype(f32)     # kernel casts h to bf16 for matmul 2
    ref_matched = jax.nn.softmax(h_ref @ w2b + b2b, axis=1)
    assert jnp.allclose(out, ref_matched, atol=1e-2), "mismatch vs matched-precision reference"

    # Reference 2: original full-f32 PyTorch math (looser tolerance covers bf16 params/IO).
    ref_f32 = jax.nn.softmax(jnp.maximum(state @ w1 + b1, 0.0) @ w2 + b2, axis=1)
    assert jnp.allclose(out, ref_f32, atol=2.5e-2), "mismatch vs f32 reference"

    # Rows must (approximately) sum to 1; normalization is an exact divide, the residual
    # error here is just bf16 output quantization of the probabilities.
    assert jnp.allclose(jnp.sum(out, axis=1), 1.0, atol=1.5e-2), "softmax rows must sum to 1"

    print("KERNEL_OK")
</pallas_src>

<mosaic_0001>
module attributes {stable_mosaic.version = 11 : i64} {
  func.func @actor_kernel(%arg0: i32, %arg1: memref<16x16xbf16, #tpu.memory_space<vmem>>, %arg2: memref<176x128xbf16, #tpu.memory_space<vmem>>, %arg3: memref<16x128xbf16, #tpu.memory_space<vmem>>) attributes {dimension_semantics = [#tpu.dimension_semantics<parallel>], iteration_bounds = array<i64: 2>, scalar_prefetch = 0 : i64, scratch_operands = 0 : i64, tpu.core_type = #tpu.core_type<tc>, window_params = [{transform_indices = @transform_0, window_bounds = array<i64: 16, 16>}, {pipeline_mode = #tpu.pipeline_mode<synchronous>, transform_indices = @transform_1, window_bounds = array<i64: 176, 128>}, {transform_indices = @transform_2, window_bounds = array<i64: 16, 128>}]} {
    %c0 = arith.constant 0 : index
    %c0_0 = arith.constant 0 : index
    %0 = vector.load %arg1[%c0, %c0_0] : memref<16x16xbf16, #tpu.memory_space<vmem>>, vector<16x16xbf16>
    %c0_1 = arith.constant 0 : index
    %c0_2 = arith.constant 0 : index
    %1 = vector.load %arg2[%c0_1, %c0_2] : memref<176x128xbf16, #tpu.memory_space<vmem>>, vector<16x128xbf16>
    %c16 = arith.constant 16 : index
    %c0_3 = arith.constant 0 : index
    %2 = vector.load %arg2[%c16, %c0_3] : memref<176x128xbf16, #tpu.memory_space<vmem>>, vector<16x128xbf16>
    %3 = arith.extf %2 : vector<16x128xbf16> to vector<16x128xf32>
    %4 = vector.extract_strided_slice %3 {offsets = [0, 0], sizes = [1, 128], strides = [1, 1]} : vector<16x128xf32> to vector<1x128xf32>
    %c32 = arith.constant 32 : index
    %c0_4 = arith.constant 0 : index
    %5 = vector.load %arg2[%c32, %c0_4] : memref<176x128xbf16, #tpu.memory_space<vmem>>, vector<128x128xbf16>
    %c160 = arith.constant 160 : index
    %c0_5 = arith.constant 0 : index
    %6 = vector.load %arg2[%c160, %c0_5] : memref<176x128xbf16, #tpu.memory_space<vmem>>, vector<16x128xbf16>
    %7 = arith.extf %6 : vector<16x128xbf16> to vector<16x128xf32>
    %8 = vector.extract_strided_slice %7 {offsets = [0, 0], sizes = [1, 128], strides = [1, 1]} : vector<16x128xf32> to vector<1x128xf32>
    %cst = arith.constant dense<0.000000e+00> : vector<16x128xf32>
    %9 = tpu.matmul %0, %1, %cst {dimension_numbers = #tpu.dot_dimension_numbers<[1], [0], [0], [1], [0, 0, 1, 1], [], []>} : vector<16x16xbf16>, vector<16x128xbf16>, vector<16x128xf32> -> vector<16x128xf32>
    %10 = vector.broadcast %4 : vector<1x128xf32> to vector<16x128xf32>
    %11 = arith.addf %9, %10 : vector<16x128xf32>
    %cst_6 = arith.constant 0.000000e+00 : f32
    %12 = vector.broadcast %cst_6 : f32 to vector<16x128xf32>
    %13 = arith.maximumf %11, %12 : vector<16x128xf32>
    %14 = arith.truncf %13 : vector<16x128xf32> to vector<16x128xbf16>
    %cst_7 = arith.constant dense<0.000000e+00> : vector<16x128xf32>
    %15 = tpu.matmul %14, %5, %cst_7 {dimension_numbers = #tpu.dot_dimension_numbers<[1], [0], [0], [1], [0, 0, 1, 1], [], []>} : vector<16x128xbf16>, vector<128x128xbf16>, vector<16x128xf32> -> vector<16x128xf32>
    %16 = vector.broadcast %8 : vector<1x128xf32> to vector<16x128xf32>
    %17 = arith.addf %15, %16 : vector<16x128xf32>
    %cst_8 = arith.constant dense<0xFF800000> : vector<16xf32>
    %18 = vector.multi_reduction <maximumf>, %17, %cst_8 [1] : vector<16x128xf32> to vector<16xf32>
    %19 = vector.shape_cast %18 : vector<16xf32> to vector<16x1xf32>
    %20 = vector.broadcast %19 : vector<16x1xf32> to vector<16x128xf32>
    %21 = arith.subf %17, %20 : vector<16x128xf32>
    %22 = math.exp %21 : vector<16x128xf32>
    %cst_9 = arith.constant dense<0.000000e+00> : vector<16xf32>
    %23 = vector.multi_reduction <add>, %22, %cst_9 [1] : vector<16x128xf32> to vector<16xf32>
    %24 = vector.shape_cast %23 : vector<16xf32> to vector<16x1xf32>
    %25 = vector.broadcast %24 : vector<16x1xf32> to vector<16x128xf32>
    %26 = arith.divf %22, %25 : vector<16x128xf32>
    %27 = arith.truncf %26 : vector<16x128xf32> to vector<16x128xbf16>
    %c0_10 = arith.constant 0 : index
    %c0_11 = arith.constant 0 : index
    %28 = vector.load %arg3[%c0_10, %c0_11] : memref<16x128xbf16, #tpu.memory_space<vmem>>, vector<16x128xbf16>
    tpu.vector_store %arg3[%c0_10, %c0_11], %27 {strides = array<i32>} : memref<16x128xbf16, #tpu.memory_space<vmem>>, vector<16x128xbf16>,
    return
  }
  func.func @transform_0(%arg0: i32) -> (i32, i32) {
    %c0_i32 = arith.constant 0 : i32
    %c0_i32_0 = arith.constant 0 : i32
    return %arg0, %c0_i32 : i32, i32
  }
  func.func @transform_1(%arg0: i32) -> (i32, i32) {
    %c0_i32 = arith.constant 0 : i32
    %c0_i32_0 = arith.constant 0 : i32
    %c0_i32_1 = arith.constant 0 : i32
    return %c0_i32, %c0_i32_0 : i32, i32
  }
  func.func @transform_2(%arg0: i32) -> (i32, i32) {
    %c0_i32 = arith.constant 0 : i32
    %c0_i32_0 = arith.constant 0 : i32
    return %arg0, %c0_i32 : i32, i32
  }
}

</mosaic_0001>

<llo_original>
// kernel: actor_forward.1
$region0: #{actor_forward.1}
  #allocation0 [shape = 'u32[]', space=smem, size = 0x4, offset = 0x4, fixed_abs, tag = 'smem constant byte address 0x4 - core index']
  #allocation1 [shape = 'u32[144,128]{1,0:T(1,128)}', space=vmem, size = 0x12000, scoped, tag = 'internal scratch']
  %s0 = inlined_call_operand.vmem [shape: bf16[32,16], index: 0, kind: input, shape index: {}]
  %s1 = inlined_call_operand.hbm [shape: bf16[176,128], index: 1, kind: input, shape index: {}]
  %s2 = inlined_call_operand.vmem [shape: bf16[32,128], index: 2, kind: output, shape index: {}]
  %s3 = sld [smem:[#allocation0]]
  $region45: #{actor_forward.1} parent=0
    _
  %s5 = ssub.s32 1, %s3
  %s6 = scalar_select 0, %s5, %s3
  $region1: #{actor_forward.1} parent=0
    #allocation2 [shape = 'u8[45056]{0}', space=vmem, size = 0xb000, scoped, tag = 'input window, operand 1, single buffered']
    #allocation3 [shape = 's32[2]{0}', space=sflag, size = 0x8, scoped, tag = 'scoped memory for actor_forward.1']
    %7 = vsyncpa [#allocation3], 0
    loop: start=0, step=1, limit=4
    $region2: #{actor_forward.1} parent=1 // loop_pre_header
      _
    $region3: #{actor_forward.1} parent=1 // loop_header
      %s9 = sphi 0, %s13
      %p10 = scmp.ge.s32.totalorder %s9, 4
      %s19 = sphi 0, %s21
      %s22 = sphi 0, %s19
      %s23 = sphi 0, %s22
      %s39 = sphi 0, %s23
      %s43 = sphi 0, %s43
      %s45 = sphi 0, %s43
      %s46 = sphi 0, %s45
      %s60 = sphi 0, %s46
      %s66 = sphi 0, %s68
      %s69 = sphi 0, %s66
      %s70 = sphi 0, %s69
      %s86 = sphi 0, %s70
    $region4: #{actor_forward.1} parent=1 // loop_header_branch
      %12 = sbr.rel (%p10) target = $region8
    $region5: #{actor_forward.1} parent=1 // loop_body
      %s14 = ssub.s32 %s9, 1
      %s15 = ssub.s32 %s9, 2
      %s16 = sadd.s32 %s9, 1
      %s17 = ssub.s32 %s9, %s16
      %p18 = scmp.eq.s32.totalorder %s17, 0
      %s20 = sadd.s32 %s19, 1
      %s21 = scalar_select %p18, %s19, %s20
      %p24 = pneg %p18
      %p25 = scmp.eq.s32.totalorder %s9, 1
      %p26 = por %p24, %p25
      %p27 = scmp.ne.s32.totalorder %s19, %s22
      %p28 = scmp.eq.s32.totalorder %s9, 0
      %p29 = por %p27, %p28
      %p30 = scmp.ne.s32.totalorder %s19, %s22
      %p31 = scmp.eq.s32.totalorder %s14, 1
      %p32 = por %p30, %p31
      %p33 = scmp.ne.s32.totalorder %s22, %s23
      %p34 = scmp.eq.s32.totalorder %s14, 0
      %p35 = por %p33, %p34
      %p36 = scmp.ne.s32.totalorder %s22, %s23
      %p37 = scmp.eq.s32.totalorder %s15, 1
      %p38 = por %p36, %p37
      %p40 = scmp.ne.s32.totalorder %s23, %s39
      %p41 = scmp.eq.s32.totalorder %s15, 0
      %p42 = por %p40, %p41
      %s44 = sadd.s32 %s43, 1
      %p47 = scmp.eq.s32.totalorder %s9, 1
      %p48 = scmp.ne.s32.totalorder %s43, %s45
      %p49 = scmp.eq.s32.totalorder %s9, 0
      %p50 = por %p48, %p49
      %p51 = scmp.ne.s32.totalorder %s43, %s45
      %p52 = scmp.eq.s32.totalorder %s14, 1
      %p53 = por %p51, %p52
      %p54 = scmp.ne.s32.totalorder %s45, %s46
      %p55 = scmp.eq.s32.totalorder %s14, 0
      %p56 = por %p54, %p55
      %p57 = scmp.ne.s32.totalorder %s45, %s46
      %p58 = scmp.eq.s32.totalorder %s15, 1
      %p59 = por %p57, %p58
      %p61 = scmp.ne.s32.totalorder %s46, %s60
      %p62 = scmp.eq.s32.totalorder %s15, 0
      %p63 = por %p61, %p62
      %s64 = ssub.s32 %s9, %s16
      %p65 = scmp.eq.s32.totalorder %s64, 0
      %s67 = sadd.s32 %s66, 1
      %s68 = scalar_select %p65, %s66, %s67
      %p71 = pneg %p65
      %p72 = scmp.eq.s32.totalorder %s9, 1
      %p73 = por %p71, %p72
      %p74 = scmp.ne.s32.totalorder %s66, %s69
      %p75 = scmp.eq.s32.totalorder %s9, 0
      %p76 = por %p74, %p75
      %p77 = scmp.ne.s32.totalorder %s66, %s69
      %p78 = scmp.eq.s32.totalorder %s14, 1
      %p79 = por %p77, %p78
      %p80 = scmp.ne.s32.totalorder %s69, %s70
      %p81 = scmp.eq.s32.totalorder %s14, 0
      %p82 = por %p80, %p81
      %p83 = scmp.ne.s32.totalorder %s69, %s70
      %p84 = scmp.eq.s32.totalorder %s15, 1
      %p85 = por %p83, %p84
      %p87 = scmp.ne.s32.totalorder %s70, %s86
      %p88 = scmp.eq.s32.totalorder %s15, 0
      %p89 = por %p87, %p88
      %p90 = scmp.le.s32.totalorder 1, %s9
      %p91 = scmp.lt.s32.totalorder %s9, 3
      %p92 = pnand %p90, %p91
      %p93 = pneg %p92
      // Predicated region
      $region9: #{actor_forward.1} parent=5 // pred_check
        _
      $region10: #{actor_forward.1} parent=5 // pred_check_branch
        %95 = sbr.rel (%p92) target = $region12
      $region11: #{actor_forward.1} parent=5 // pred_region
        %s96 = ssub.s32 %s9, 1
        // Predicated region
        $region13: #{actor_forward.1} parent=11 // pred_check
          %p97 = pneg %p56
        $region14: #{actor_forward.1} parent=11 // pred_check_branch
          %99 = sbr.rel (%p97) target = $region16
        $region15: #{actor_forward.1} parent=11 // pred_region
          %s101 = ssub.s32 1408, 1408
          %102 = vsyncadd [#allocation3], %s101
          %s103 = sshll.u32 [#allocation2], 4
          %s104 = int_to_ptr.vmem [resolvable:$true] %s103
          %109 = dma.hbm_to_vmem [thread:$0]  %s1, 1408, %s104, [#allocation3], 64, 64, 4
        $region16: #{actor_forward.1} parent=11 // pred_fallthru
          _
      $region12: #{actor_forward.1} parent=5 // pred_fallthru
        _
      %p110 = scmp.lt.s32.totalorder %s9, 2
      // Predicated region
      $region17: #{actor_forward.1} parent=5 // pred_check
        %p111 = pneg %p110
      $region18: #{actor_forward.1} parent=5 // pred_check_branch
        %113 = sbr.rel (%p111) target = $region20
      $region19: #{actor_forward.1} parent=5 // pred_region
        // Predicated region
        $region21: #{actor_forward.1} parent=19 // pred_check
          %p114 = pneg %p29
        $region22: #{actor_forward.1} parent=19 // pred_check_branch
          %116 = sbr.rel (%p114) target = $region24
        $region23: #{actor_forward.1} parent=19 // pred_region
          %s117 = smul.u32 2, %s9
          %p118 = scmp.lt.s32.totalorder %s117, 3
          %s119 = scalar_select %p118, %s117, 3
          %s120 = smul.addr %s119, 4
          %s121 = scalar_lea.vmem %s0, %s120
          %s122 = smul.u32 2, %s9
        $region24: #{actor_forward.1} parent=19 // pred_fallthru
          _
      $region20: #{actor_forward.1} parent=5 // pred_fallthru
        _
      %p123 = scmp.le.s32.totalorder 1, %s9
      %p124 = scmp.lt.s32.totalorder %s9, 3
      %p125 = pnand %p123, %p124
      %p126 = pneg %p125
      // Predicated region
      $region25: #{actor_forward.1} parent=5 // pred_check
        _
      $region26: #{actor_forward.1} parent=5 // pred_check_branch
        %128 = sbr.rel (%p125) target = $region28
      $region27: #{actor_forward.1} parent=5 // pred_region
        %s129 = ssub.s32 %s9, 1
        // Predicated region
        $region29: #{actor_forward.1} parent=27 // pred_check
          %p130 = pneg %p56
        $region30: #{actor_forward.1} parent=27 // pred_check_branch
          %132 = sbr.rel (%p130) target = $region32
        $region31: #{actor_forward.1} parent=27 // pred_region
          %133 = dma.done [#allocation3], 1408
        $region32: #{actor_forward.1} parent=27 // pred_fallthru
          _
        %s134 = smul.u32 2, %s14
        %p135 = scmp.lt.s32.totalorder %s134, 3
        %s136 = scalar_select %p135, %s134, 3
        %s137 = smul.addr %s136, 4
        %s138 = scalar_lea.vmem %s0, %s137
        %p139 = pneg %p35
        %p140 = pneg %p32
        %p141 = pneg %p56
        %p142 = pneg %p53
        %p143 = pneg %p82
        %p144 = pneg %p79
        %s145 = smul.u32 2, %s14
        %p146 = scmp.lt.s32.totalorder %s145, 3
        %s147 = scalar_select %p146, %s145, 3
        %s148 = smul.addr %s147, 4
        %s149 = scalar_lea.vmem %s2, %s148
        %s150 = smul.u32 2, %s14
        %p151 = scmp.lt.s32.totalorder %s150, 3
        %s152 = scalar_select %p151, %s150, 3
        %s153 = smul.addr %s152, 4
        %s154 = scalar_lea.vmem %s0, %s153
        %s155 = smul.u32 2, %s14
        %s156 = smul.u32 2, %s14
        %p157 = scmp.lt.s32.totalorder %s156, 3
        %s158 = scalar_select %p157, %s156, 3
        %s159 = smul.addr %s158, 4
        %s160 = scalar_lea.vmem %s2, %s159
        %s161 = smul.u32 2, %s14
        %v163 = vld [vmem:[%s154] sm:$0xf]
        %v164 = vld [vmem:[%s154 + $0x4] sm:$0xf]
        %v165 = vld [vmem:[#allocation2] sm:$0xf]
        %v166 = vld [vmem:[#allocation2 + $0x4] sm:$0xf]
        %v167 = vld [vmem:[#allocation2 + $0x8] sm:$0xf]
        %v168 = vunpack.c.l.bf16 %v167
        %v169 = vld [vmem:[#allocation2 + $0x10] sm:$0xf]
        %v170 = vld [vmem:[#allocation2 + $0x14] sm:$0xf]
        %v171 = vld [vmem:[#allocation2 + $0x18] sm:$0xf]
        %v172 = vld [vmem:[#allocation2 + $0x1c] sm:$0xf]
        %v173 = vld [vmem:[#allocation2 + $0x20] sm:$0xf]
        %v174 = vld [vmem:[#allocation2 + $0x24] sm:$0xf]
        %v175 = vld [vmem:[#allocation2 + $0x28] sm:$0xf]
        %v176 = vld [vmem:[#allocation2 + $0x2c] sm:$0xf]
        %v177 = vld [vmem:[#allocation2 + $0x30] sm:$0xf]
        %v178 = vld [vmem:[#allocation2 + $0x34] sm:$0xf]
        %v179 = vld [vmem:[#allocation2 + $0x38] sm:$0xf]
        %v180 = vld [vmem:[#allocation2 + $0x3c] sm:$0xf]
        %v181 = vld [vmem:[#allocation2 + $0x40] sm:$0xf]
        %v182 = vld [vmem:[#allocation2 + $0x44] sm:$0xf]
        %v183 = vld [vmem:[#allocation2 + $0x48] sm:$0xf]
        %v184 = vld [vmem:[#allocation2 + $0x4c] sm:$0xf]
        %v185 = vld [vmem:[#allocation2 + $0x50] sm:$0xf]
        %v186 = vunpack.c.l.bf16 %v185
        %v187 = vlaneseq
        %v188 = vshrl.u32 %v187, 7
        %v189 = vsub.s32 0, %v188
        %v190 = vrot.slane %v168, %v189
        %v193 = vunpack.c.l.b16 %v163
        %v194 = vunpack.c.l.b16 %v164
        %v195 = vpack.c.b16 %v194, %v193
        %v198 = vunpack.c.l.b16 %v165
        %v199 = vunpack.c.l.b16 %v166
        %v200 = vpack.c.b16 %v199, %v198
        %vm202 = vcmask 130048
        %v204 = vsel %vm202, %v195, 0
        %206 = vmatprep.subr.bf16.mxu0 0
        %207 = vmatpush1.bf16.msra.mxu0 %v200
        %208 = vmatprep.subr.bf16.mxu0 0
        %209 = vmatpush1.bf16.msra.mxu0 0
        %210 = vmatprep.subr.bf16.mxu0 0
        %211 = vmatpush1.bf16.msra.mxu0 0
        %212 = vmatprep.subr.bf16.mxu0 0
        %213 = vmatpush1.bf16.msra.mxu0 0
        %214 = vmatprep.subr.bf16.mxu0 0
        %215 = vmatpush1.bf16.msra.mxu0 0
        %216 = vmatprep.subr.bf16.mxu0 0
        %217 = vmatpush1.bf16.msra.mxu0 0
        %218 = vmatprep.subr.bf16.mxu0 0
        %219 = vmatpush1.bf16.msra.mxu0 0
        %220 = vmatprep.subr.bf16.mxu0 0
        %221 = vmatpush1.bf16.msra.mxu0 0
        %222 = vmatprep.subr.bf16.mxu0 0
        %223 = vmatpush1.bf16.msra.mxu0 0
        %224 = vmatprep.subr.bf16.mxu0 0
        %225 = vmatpush1.bf16.msra.mxu0 0
        %226 = vmatprep.subr.bf16.mxu0 0
        %227 = vmatpush1.bf16.msra.mxu0 0
        %228 = vmatprep.subr.bf16.mxu0 0
        %229 = vmatpush1.bf16.msra.mxu0 0
        %230 = vmatprep.subr.bf16.mxu0 0
        %231 = vmatpush1.bf16.msra.mxu0 0
        %232 = vmatprep.subr.bf16.mxu0 0
        %233 = vmatpush1.bf16.msra.mxu0 0
        %234 = vmatprep.subr.bf16.mxu0 0
        %235 = vmatpush1.bf16.msra.mxu0 0
        %236 = vmatprep.subr.bf16.mxu0 0
        %237 = vmatpush1.bf16.msra.mxu0 0
        %238 = vmatprep.mubr.bf16.mxu0 0
        %239 = vmatmul.mubr.bf16.gmra.mrb[0].mxu0 %v204
        %v240 = vpop.f32.mrb[0].mxu0
        %v241 = vadd.f32 %v190, %v240
        %v242 = vpop.f32.mrb[0].mxu0
        %v243 = vpop.f32.mrb[0].mxu0
        %v244 = vadd.f32 %v190, %v243
        %v245 = vpop.f32.mrb[0].mxu0
        %246 = vdwg.mxu0
        %v247 = vmax.f32 %v241, 0.0
        %v248 = vmax.f32 %v244, 0.0
        %v249 = vpack.c.bf16 %v248, %v247
        %v250 = vlaneseq
        %v251 = vshrl.u32 %v250, 7
        %v252 = vsub.s32 0, %v251
        %v253 = vrot.slane %v186, %v252
        %v270 = vunpack.c.l.b16 %v169
        %v271 = vunpack.c.l.b16 %v170
        %v272 = vunpack.c.l.b16 %v171
        %v273 = vunpack.c.l.b16 %v172
        %v274 = vunpack.c.l.b16 %v173
        %v275 = vunpack.c.l.b16 %v174
        %v276 = vunpack.c.l.b16 %v175
        %v277 = vunpack.c.l.b16 %v176
        %v278 = vunpack.c.l.b16 %v177
        %v279 = vunpack.c.l.b16 %v178
        %v280 = vunpack.c.l.b16 %v179
        %v281 = vunpack.c.l.b16 %v180
        %v282 = vunpack.c.l.b16 %v181
        %v283 = vunpack.c.l.b16 %v182
        %v284 = vunpack.c.l.b16 %v183
        %v285 = vunpack.c.l.b16 %v184
        %v286 = vpack.c.b16 %v271, %v270
        %v287 = vpack.c.b16 %v273, %v272
        %v288 = vpack.c.b16 %v275, %v274
        %v289 = vpack.c.b16 %v277, %v276
        %v290 = vpack.c.b16 %v279, %v278
        %v291 = vpack.c.b16 %v281, %v280
        %v292 = vpack.c.b16 %v283, %v282
        %v293 = vpack.c.b16 %v285, %v284
        %302 = vmatprep.subr.bf16.mxu0 0
        %303 = vmatpush1.bf16.msra.mxu0 %v286
        %304 = vmatprep.subr.bf16.mxu0 0
        %305 = vmatpush1.bf16.msra.mxu0 %v287
        %306 = vmatprep.subr.bf16.mxu0 0
        %307 = vmatpush1.bf16.msra.mxu0 %v288
        %308 = vmatprep.subr.bf16.mxu0 0
        %309 = vmatpush1.bf16.msra.mxu0 %v289
        %310 = vmatprep.subr.bf16.mxu0 0
        %311 = vmatpush1.bf16.msra.mxu0 %v290
        %312 = vmatprep.subr.bf16.mxu0 0
        %313 = vmatpush1.bf16.msra.mxu0 %v291
        %314 = vmatprep.subr.bf16.mxu0 0
        %315 = vmatpush1.bf16.msra.mxu0 %v292
        %316 = vmatprep.subr.bf16.mxu0 0
        %317 = vmatpush1.bf16.msra.mxu0 %v293
        %318 = vmatprep.subr.bf16.mxu0 0
        %319 = vmatpush1.bf16.msra.mxu0 0
        %320 = vmatprep.subr.bf16.mxu0 0
        %321 = vmatpush1.bf16.msra.mxu0 0
        %322 = vmatprep.subr.bf16.mxu0 0
        %323 = vmatpush1.bf16.msra.mxu0 0
        %324 = vmatprep.subr.bf16.mxu0 0
        %325 = vmatpush1.bf16.msra.mxu0 0
        %326 = vmatprep.subr.bf16.mxu0 0
        %327 = vmatpush1.bf16.msra.mxu0 0
        %328 = vmatprep.subr.bf16.mxu0 0
        %329 = vmatpush1.bf16.msra.mxu0 0
        %330 = vmatprep.subr.bf16.mxu0 0
        %331 = vmatpush1.bf16.msra.mxu0 0
        %332 = vmatprep.subr.bf16.mxu0 0
        %333 = vmatpush1.bf16.msra.mxu0 0
        %334 = vmatprep.mubr.bf16.mxu0 0
        %335 = vmatmul.mubr.bf16.gmra.mrb[0].mxu0 %v249
        %v336 = vpop.f32.mrb[0].mxu0
        %v337 = vadd.f32 %v253, %v336
        %v338 = vpop.f32.mrb[0].mxu0
        %v339 = vpop.f32.mrb[0].mxu0
        %v340 = vadd.f32 %v253, %v339
        %v341 = vpop.f32.mrb[0].mxu0
        %342 = vdwg.mxu0
        %343 = vmax.xlane.f32.xlu0 %v337
        %v344 = vpop.xlane.xlu0 %343
        %345 = vmax.xlane.f32.xlu0 %v340
        %v346 = vpop.xlane.xlu0 %345
        %v347 = vsub.f32 %v337, %v344
        %v348 = vsub.f32 %v340, %v346
        %v349 = vmul.f32 %v347, 1.442695
        %v350 = vpow.pop %v349
        %v351 = vmul.f32 %v348, 1.442695
        %v352 = vpow.pop %v351
        %353 = vadd.xlane.f32.xlu0 %v350
        %v354 = vpop.xlane.xlu0 %353
        %355 = vadd.xlane.f32.xlu0 %v352
        %v356 = vpop.xlane.xlu0 %355
        %v357 = vrcp.pop %v354
        %v358 = vmul.f32 %v350, %v357
        %v359 = vrcp.pop %v356
        %v360 = vmul.f32 %v352, %v359
        %v361 = vpack.c.bf16 %v360, %v358
        %v363 = vunpack.c.l.b16 %v361
        %v364 = vunpack.c.h.b16 %v361
        %v365 = vpack.c.b16 %v363, %v363
        %v366 = vpack.c.b16 %v364, %v364
        %369 = vst [vmem:[%s160] sm:$0xf] %v365
        %370 = vst [vmem:[%s160 + $0x4] sm:$0xf] %v366
        %s371 = smul.u32 2, %s14
        %p372 = scmp.lt.s32.totalorder %s371, 3
        %s373 = scalar_select %p372, %s371, 3
        %s374 = smul.addr %s373, 4
        %s375 = scalar_lea.vmem %s2, %s374
        // Predicated region
        $region33: #{actor_forward.1} parent=27 // pred_check
          %p376 = pneg %p79
        $region34: #{actor_forward.1} parent=27 // pred_check_branch
          %378 = sbr.rel (%p376) target = $region36
        $region35: #{actor_forward.1} parent=27 // pred_region
          %s379 = smul.u32 2, %s14
        $region36: #{actor_forward.1} parent=27 // pred_fallthru
          _
      $region28: #{actor_forward.1} parent=5 // pred_fallthru
        _
      %p380 = scmp.le.s32.totalorder 2, %s9
      // Predicated region
      $region37: #{actor_forward.1} parent=5 // pred_check
        %p381 = pneg %p380
      $region38: #{actor_forward.1} parent=5 // pred_check_branch
        %383 = sbr.rel (%p381) target = $region40
      $region39: #{actor_forward.1} parent=5 // pred_region
        %s384 = ssub.s32 %s9, 2
        // Predicated region
        $region41: #{actor_forward.1} parent=39 // pred_check
          %p385 = pneg %p85
        $region42: #{actor_forward.1} parent=39 // pred_check_branch
          %387 = sbr.rel (%p385) target = $region44
        $region43: #{actor_forward.1} parent=39 // pred_region
          %s388 = smul.u32 2, %s15
          %p389 = scmp.lt.s32.totalorder %s388, 3
          %s390 = scalar_select %p389, %s388, 3
          %s391 = smul.addr %s390, 4
          %s392 = scalar_lea.vmem %s2, %s391
        $region44: #{actor_forward.1} parent=39 // pred_fallthru
          _
      $region40: #{actor_forward.1} parent=5 // pred_fallthru
        _
    $region6: #{actor_forward.1} parent=1 // loop_footer
      %s13 = sadd.s32 1, %s9
    $region7: #{actor_forward.1} parent=1 // loop_footer_branch
      %8 = sbr.rel target = $region3
    $region8: #{actor_forward.1} parent=1 // loop_exit
      _
    %393 = vsyncpa [#allocation3], 1
    %s394 = scalar_lea.sflag [#allocation3], 1
    %395 = vsyncpa %s394, 1

</llo_original>
